<compile_context>
chip_gen: v7x
topology: tpu7x:2x2x1
jax: 0.10.0
libtpu: 0.0.40
codegen_flags: <defaults>
</compile_context>

<pallas_src>
import functools

import jax
import jax.numpy as jnp
from jax.experimental import pallas as pl
from jax.experimental.pallas import tpu as pltpu

LOG_STD_MAX = 2.0
LOG_STD_MIN = -5.0
_LS_SCALE = 0.5 * (LOG_STD_MAX - LOG_STD_MIN)   # 3.5
_LS_SHIFT = LOG_STD_MIN + _LS_SCALE             # -1.5 (folded affine constants)

HIDDEN = 256      # fc1 / fc2 width (matches nn.Linear(*, 256))
HEAD_PAD = 128    # fused head output padded to one full lane tile

SUBLANE = 16      # bf16 sublane pack for the matmul LHS
MAX_TILE_B = 512  # per-step batch-tile cap (kernel is overhead-bound below this)
MIN_GRID = 2      # keep >= 2 grid steps so v7x megacore can shard the batch


def _round_up(n, m):
    return ((n + m - 1) // m) * m


def _choose_batch_tiling(B):
    """Pick (tile_b, padded_B):
       * tile_b multiple of 16, capped at MAX_TILE_B rows per grid step
       * >= 2 grid steps once there is enough work (v7x TensorCore sharding)
       * padded_B tracks B closely (avoids ~2x padding waste at e.g. B=136)
    """
    n_tiles = max(1, -(-B // MAX_TILE_B))          # ceil(B / cap)
    if n_tiles < MIN_GRID and B >= 4 * SUBLANE:    # enough rows to split
        n_tiles = MIN_GRID
    tile_b = _round_up(-(-B // n_tiles), SUBLANE)  # ceil(B / n_tiles) -> x16
    return tile_b, tile_b * n_tiles


def actor_kernel(x_ref, w1_ref, w2h_ref, b_ref, out_ref, *, act_dim):
    """One batch-tile of the Actor MLP.

    x_ref   : (TILE_B, obs_dim)           f32
    w1_ref  : (obs_dim, HIDDEN)           bf16
    w2h_ref : (HIDDEN, HIDDEN + HEAD_PAD) bf16   [ fc2 | fc_mean|fc_logstd|0-pad ]
    b_ref   : (3, HIDDEN)                 f32    rows: b1, b2, b_heads(padded)
    out_ref : (TILE_B, HEAD_PAD)          f32    cols [0,A)=mean, [A,2A)=log_std
    """
    bf16 = jnp.bfloat16

    # fc1 -> relu (bf16 MXU inputs, f32 accumulate, f32 epilogue; v5e-safe)
    h1 = jnp.dot(x_ref[...].astype(bf16), w1_ref[...],
                 preferred_element_type=jnp.float32)
    h1 = jnp.maximum(h1 + b_ref[0:1, :], 0.0)

    # fc2 -> relu
    h2 = jnp.dot(h1.astype(bf16), w2h_ref[:, :HIDDEN],
                 preferred_element_type=jnp.float32)
    h2 = jnp.maximum(h2 + b_ref[1:2, :], 0.0)

    # fused heads: single MXU pass over the padded 128-wide head weight.
    heads = jnp.dot(h2.astype(bf16), w2h_ref[:, HIDDEN:],
                    preferred_element_type=jnp.float32)
    heads = heads + b_ref[2:3, 0:HEAD_PAD]

    # Folded log_std affine (3.5*tanh - 1.5); tanh runs on the EUP slot which
    # has slack, so it is applied to all 128 lanes and the mean half is kept
    # via a lane-index select (cheaper than splitting into two head slabs).
    ls = _LS_SCALE * jnp.tanh(heads) + _LS_SHIFT
    col = jax.lax.broadcasted_iota(jnp.int32, heads.shape, 1)
    out_ref[...] = jnp.where(col >= act_dim, ls, heads).astype(out_ref.dtype)


@functools.partial(jax.jit, static_argnames=("act_dim",))
def actor_forward(x, packed, *, act_dim):
    """Runs the whole Actor MLP as one Pallas kernel, gridded over batch."""
    B, obs_dim = x.shape
    assert 2 * act_dim <= HEAD_PAD

    tile_b, b_pad = _choose_batch_tiling(B)
    if b_pad != B:
        x = jnp.pad(x, ((0, b_pad - B), (0, 0)))

    n_steps = b_pad // tile_b
    # Deeper buffering on the small/strided x DMA and on the output writeback
    # (the largest per-step HBM traffic) only pays off on longer grids.
    deep = pl.Buffered(3) if n_steps >= 3 else None

    def bspec(shape, imap, mode=None):
        if mode is None:
            return pl.BlockSpec(shape, imap)
        return pl.BlockSpec(shape, imap, pipeline_mode=mode)

    w1, w2h, bias = packed["w1"], packed["w2h"], packed["bias"]

    flops = 2 * b_pad * (obs_dim * HIDDEN + HIDDEN * HIDDEN + HIDDEN * HEAD_PAD)
    bytes_accessed = (x.size * 4 + w1.size * 2 + w2h.size * 2 + bias.size * 4
                      + b_pad * HEAD_PAD * 4)

    # NOTE(v5e option): emit the head slab as bf16 (out_shape dtype + final
    # astype) and upcast in the wrapper to halve vst/HBM writeback if strict
    # f32 output numerics are not required downstream.
    out = pl.pallas_call(
        functools.partial(actor_kernel, act_dim=act_dim),
        out_shape=jax.ShapeDtypeStruct((b_pad, HEAD_PAD), jnp.float32),
        grid=(n_steps,),
        in_specs=[
            bspec((tile_b, obs_dim), lambda i: (i, 0), deep),              # x tile
            bspec((obs_dim, HIDDEN), lambda i: (0, 0)),                    # w1 (resident)
            bspec((HIDDEN, HIDDEN + HEAD_PAD), lambda i: (0, 0)),          # w2|heads
            bspec((3, HIDDEN), lambda i: (0, 0)),                          # bias pack
        ],
        out_specs=bspec((tile_b, HEAD_PAD), lambda i: (i, 0), deep),
        compiler_params=pltpu.CompilerParams(
            dimension_semantics=("parallel",),
            vmem_limit_bytes=32 * 1024 * 1024),
        cost_estimate=pl.CostEstimate(
            flops=flops,
            transcendentals=b_pad * HEAD_PAD,
            bytes_accessed=bytes_accessed),
    )(x, w1, w2h, bias)

    mean = out[:B, :act_dim]
    log_std = out[:B, act_dim:2 * act_dim]
    return mean, log_std


def init_params(key, obs_dim, act_dim):
    """Deterministic synthetic init (uniform, roughly PyTorch Linear-like)."""
    ks = jax.random.split(key, 8)

    def lin(kw, kb, fan_in, fan_out):
        bound = 1.0 / jnp.sqrt(jnp.float32(fan_in))
        w = jax.random.uniform(kw, (fan_in, fan_out), jnp.float32, -bound, bound)
        b = jax.random.uniform(kb, (1, fan_out), jnp.float32, -bound, bound)
        return w, b

    w1, b1 = lin(ks[0], ks[1], obs_dim, HIDDEN)
    w2, b2 = lin(ks[2], ks[3], HIDDEN, HIDDEN)
    wm, bm = lin(ks[4], ks[5], HIDDEN, act_dim)
    ws, bs = lin(ks[6], ks[7], HIDDEN, act_dim)
    return dict(w1=w1, b1=b1, w2=w2, b2=b2, wm=wm, bm=bm, ws=ws, bs=bs)


def pack_params(params, act_dim):
    """Fuse/pad/cast parameters for the kernel (once, outside the hot path).

    - heads: [wm | ws] -> zero-pad to HEAD_PAD lanes, concat onto w2 -> (256, 384) bf16
    - biases: [b1; b2; (bm|bs) padded] -> (3, 256) f32
    - matmul weights stored as bf16 (MXU-native); biases kept f32 for the epilogue.

    NOTE: bf16 weight storage + in-kernel bf16 casts are a deliberate numerics
    choice (MXU-native) vs an f32 PyTorch Actor; acceptable for SAC.
    """
    wh = jnp.concatenate([params["wm"], params["ws"]], axis=1)          # (256, 2A)
    wh = jnp.pad(wh, ((0, 0), (0, HEAD_PAD - 2 * act_dim)))             # (256, 128)
    w2h = jnp.concatenate([params["w2"], wh], axis=1).astype(jnp.bfloat16)

    bh = jnp.concatenate([params["bm"], params["bs"]], axis=1)          # (1, 2A)
    bh = jnp.pad(bh, ((0, 0), (0, HIDDEN - 2 * act_dim)))               # (1, 256)
    bias = jnp.concatenate([params["b1"], params["b2"], bh], axis=0)    # (3, 256)

    return dict(
        w1=params["w1"].astype(jnp.bfloat16),
        w2h=w2h,
        bias=bias.astype(jnp.float32),
    )


def actor_reference(x, p):
    """Pure-JAX reference mirroring the PyTorch forward (bf16 MXU numerics)."""
    bf16 = jnp.bfloat16

    def dot(a, w):
        return jnp.dot(a.astype(bf16), w.astype(bf16),
                       preferred_element_type=jnp.float32)

    h1 = jnp.maximum(dot(x, p["w1"]) + p["b1"], 0.0)
    h2 = jnp.maximum(dot(h1, p["w2"]) + p["b2"], 0.0)
    mean = dot(h2, p["wm"]) + p["bm"]
    ls = jnp.tanh(dot(h2, p["ws"]) + p["bs"])
    ls = LOG_STD_MIN + 0.5 * (LOG_STD_MAX - LOG_STD_MIN) * (ls + 1.0)
    return mean, ls


if __name__ == "__main__":
    key = jax.random.PRNGKey(0)
    k_x, k_p = jax.random.split(key)

    obs_dim, act_dim = 16, 6  # small env-like shapes
    params = init_params(k_p, obs_dim, act_dim)
    packed = pack_params(params, act_dim)

    # Exercise the three tiling regimes:
    #   B=4    -> single 16-row tile (grid length 1)
    #   B=136  -> 2 x 80-row tiles (tight padding + v7x megacore split)
    #   B=1100 -> 3 x 368-row tiles (>=3 steps, Buffered(3) x/out streams)
    for batch in (4, 136, 1100):
        kx = jax.random.fold_in(k_x, batch)
        x = jax.random.normal(kx, (batch, obs_dim), jnp.float32)

        mean, log_std = actor_forward(x, packed, act_dim=act_dim)
        jax.block_until_ready((mean, log_std))

        ref_mean, ref_log_std = actor_reference(x, params)
        assert mean.shape == (batch, act_dim) and log_std.shape == (batch, act_dim)
        assert jnp.allclose(mean, ref_mean, atol=5e-3, rtol=5e-3)
        assert jnp.allclose(log_std, ref_log_std, atol=5e-3, rtol=5e-3)

    # TODO(synk): Actor.get_action (Normal.rsample / log_prob / action squash)
    # is a separate sampling method, not part of forward(); not kernelized here.

    print("KERNEL_OK")
</pallas_src>

<mosaic_0001>
module attributes {stable_mosaic.version = 11 : i64} {
  func.func @actor_kernel(%arg0: i32, %arg1: memref<16x16xf32, #tpu.memory_space<vmem>>, %arg2: memref<16x256xbf16, #tpu.memory_space<vmem>>, %arg3: memref<256x384xbf16, #tpu.memory_space<vmem>>, %arg4: memref<3x256xf32, #tpu.memory_space<vmem>>, %arg5: memref<16x128xf32, #tpu.memory_space<vmem>>) attributes {dimension_semantics = [#tpu.dimension_semantics<parallel>], iteration_bounds = array<i64: 1>, scalar_prefetch = 0 : i64, scratch_operands = 0 : i64, tpu.core_type = #tpu.core_type<tc>, window_params = [{transform_indices = @transform_0, window_bounds = array<i64: 16, 16>}, {pipeline_mode = #tpu.pipeline_mode<synchronous>, transform_indices = @transform_1, window_bounds = array<i64: 16, 256>}, {pipeline_mode = #tpu.pipeline_mode<synchronous>, transform_indices = @transform_2, window_bounds = array<i64: 256, 384>}, {pipeline_mode = #tpu.pipeline_mode<synchronous>, transform_indices = @transform_3, window_bounds = array<i64: 3, 256>}, {transform_indices = @transform_4, window_bounds = array<i64: 16, 128>}]} {
    %c0 = arith.constant 0 : index
    %c0_0 = arith.constant 0 : index
    %0 = vector.load %arg1[%c0, %c0_0] : memref<16x16xf32, #tpu.memory_space<vmem>>, vector<16x16xf32>
    %1 = arith.truncf %0 : vector<16x16xf32> to vector<16x16xbf16>
    %c0_1 = arith.constant 0 : index
    %c0_2 = arith.constant 0 : index
    %2 = vector.load %arg2[%c0_1, %c0_2] : memref<16x256xbf16, #tpu.memory_space<vmem>>, vector<16x256xbf16>
    %cst = arith.constant dense<0.000000e+00> : vector<16x256xf32>
    %3 = tpu.matmul %1, %2, %cst {dimension_numbers = #tpu.dot_dimension_numbers<[1], [0], [0], [1], [0, 0, 1, 1], [], []>} : vector<16x16xbf16>, vector<16x256xbf16>, vector<16x256xf32> -> vector<16x256xf32>
    %c0_3 = arith.constant 0 : index
    %c0_4 = arith.constant 0 : index
    %4 = vector.load %arg4[%c0_3, %c0_4] : memref<3x256xf32, #tpu.memory_space<vmem>>, vector<1x256xf32>
    %5 = vector.broadcast %4 : vector<1x256xf32> to vector<16x256xf32>
    %6 = arith.addf %3, %5 : vector<16x256xf32>
    %cst_5 = arith.constant 0.000000e+00 : f32
    %7 = vector.broadcast %cst_5 : f32 to vector<16x256xf32>
    %8 = arith.maximumf %6, %7 : vector<16x256xf32>
    %9 = arith.truncf %8 : vector<16x256xf32> to vector<16x256xbf16>
    %c0_6 = arith.constant 0 : index
    %c0_7 = arith.constant 0 : index
    %10 = vector.load %arg3[%c0_6, %c0_7] : memref<256x384xbf16, #tpu.memory_space<vmem>>, vector<256x256xbf16>
    %cst_8 = arith.constant dense<0.000000e+00> : vector<16x256xf32>
    %11 = tpu.matmul %9, %10, %cst_8 {dimension_numbers = #tpu.dot_dimension_numbers<[1], [0], [0], [1], [0, 0, 1, 1], [], []>} : vector<16x256xbf16>, vector<256x256xbf16>, vector<16x256xf32> -> vector<16x256xf32>
    %c1 = arith.constant 1 : index
    %c0_9 = arith.constant 0 : index
    %12 = vector.load %arg4[%c1, %c0_9] : memref<3x256xf32, #tpu.memory_space<vmem>>, vector<1x256xf32>
    %13 = vector.broadcast %12 : vector<1x256xf32> to vector<16x256xf32>
    %14 = arith.addf %11, %13 : vector<16x256xf32>
    %cst_10 = arith.constant 0.000000e+00 : f32
    %15 = vector.broadcast %cst_10 : f32 to vector<16x256xf32>
    %16 = arith.maximumf %14, %15 : vector<16x256xf32>
    %17 = arith.truncf %16 : vector<16x256xf32> to vector<16x256xbf16>
    %c0_11 = arith.constant 0 : index
    %c256 = arith.constant 256 : index
    %18 = vector.load %arg3[%c0_11, %c256] : memref<256x384xbf16, #tpu.memory_space<vmem>>, vector<256x128xbf16>
    %cst_12 = arith.constant dense<0.000000e+00> : vector<16x128xf32>
    %19 = tpu.matmul %17, %18, %cst_12 {dimension_numbers = #tpu.dot_dimension_numbers<[1], [0], [0], [1], [0, 0, 1, 1], [], []>} : vector<16x256xbf16>, vector<256x128xbf16>, vector<16x128xf32> -> vector<16x128xf32>
    %c2 = arith.constant 2 : index
    %c0_13 = arith.constant 0 : index
    %20 = vector.load %arg4[%c2, %c0_13] : memref<3x256xf32, #tpu.memory_space<vmem>>, vector<1x128xf32>
    %21 = vector.broadcast %20 : vector<1x128xf32> to vector<16x128xf32>
    %22 = arith.addf %19, %21 : vector<16x128xf32>
    %23 = math.tanh %22 : vector<16x128xf32>
    %cst_14 = arith.constant 3.500000e+00 : f32
    %24 = vector.broadcast %cst_14 : f32 to vector<16x128xf32>
    %25 = arith.mulf %24, %23 : vector<16x128xf32>
    %cst_15 = arith.constant -1.500000e+00 : f32
    %26 = vector.broadcast %cst_15 : f32 to vector<16x128xf32>
    %27 = arith.addf %25, %26 : vector<16x128xf32>
    %28 = tpu.iota {dimensions = array<i32: 1>} : vector<16x128xi32>
    %c6_i32 = arith.constant 6 : i32
    %29 = vector.broadcast %c6_i32 : i32 to vector<16x128xi32>
    %30 = arith.cmpi sge, %28, %29 : vector<16x128xi32>
    %31 = arith.select %30, %27, %22 : vector<16x128xi1>, vector<16x128xf32>
    %c0_16 = arith.constant 0 : index
    %c0_17 = arith.constant 0 : index
    %32 = vector.load %arg5[%c0_16, %c0_17] : memref<16x128xf32, #tpu.memory_space<vmem>>, vector<16x128xf32>
    tpu.vector_store %arg5[%c0_16, %c0_17], %31 {strides = array<i32>} : memref<16x128xf32, #tpu.memory_space<vmem>>, vector<16x128xf32>,
    return
  }
  func.func @transform_0(%arg0: i32) -> (i32, i32) {
    %c0_i32 = arith.constant 0 : i32
    %c0_i32_0 = arith.constant 0 : i32
    return %arg0, %c0_i32 : i32, i32
  }
  func.func @transform_1(%arg0: i32) -> (i32, i32) {
    %c0_i32 = arith.constant 0 : i32
    %c0_i32_0 = arith.constant 0 : i32
    %c0_i32_1 = arith.constant 0 : i32
    return %c0_i32, %c0_i32_0 : i32, i32
  }
  func.func @transform_2(%arg0: i32) -> (i32, i32) {
    %c0_i32 = arith.constant 0 : i32
    %c0_i32_0 = arith.constant 0 : i32
    %c0_i32_1 = arith.constant 0 : i32
    return %c0_i32, %c0_i32_0 : i32, i32
  }
  func.func @transform_3(%arg0: i32) -> (i32, i32) {
    %c0_i32 = arith.constant 0 : i32
    %c0_i32_0 = arith.constant 0 : i32
    %c0_i32_1 = arith.constant 0 : i32
    return %c0_i32, %c0_i32_0 : i32, i32
  }
  func.func @transform_4(%arg0: i32) -> (i32, i32) {
    %c0_i32 = arith.constant 0 : i32
    %c0_i32_0 = arith.constant 0 : i32
    return %arg0, %c0_i32 : i32, i32
  }
}

</mosaic_0001>

<llo_original>
// kernel: actor_forward.1
$region0: #{actor_forward.1}
  #allocation0 [shape = 'u32[]', space=smem, size = 0x4, offset = 0x4, fixed_abs, tag = 'smem constant byte address 0x4 - core index']
  #allocation1 [shape = 'u32[144,128]{1,0:T(1,128)}', space=vmem, size = 0x12000, scoped, tag = 'internal scratch']
  %s0 = inlined_call_operand.vmem [shape: f32[16,16], index: 0, kind: input, shape index: {}]
  %s1 = inlined_call_operand.vmem [shape: bf16[16,256], index: 1, kind: input, shape index: {}]
  %s2 = inlined_call_operand.hbm [shape: bf16[256,384], index: 2, kind: input, shape index: {}]
  %s3 = inlined_call_operand.vmem [shape: f32[3,256], index: 3, kind: input, shape index: {}]
  %s4 = inlined_call_operand.vmem [shape: f32[16,128], index: 4, kind: output, shape index: {}]
  %s5 = sld [smem:[#allocation0]]
  $region30: #{actor_forward.1} parent=0
    _
  %s7 = ssub.s32 1, %s5
  %s8 = scalar_select 0, %s7, %s5
  $region1: #{actor_forward.1} parent=0
    #allocation2 [shape = 'u8[196608]{0}', space=vmem, size = 0x30000, scoped, tag = 'input window, operand 2, single buffered']
    #allocation3 [shape = 's32[1]{0}', space=sflag, size = 0x4, scoped, tag = 'scoped memory for actor_forward.1']
    %9 = vsyncpa [#allocation3], 0
    // Predicated region
    $region2: #{actor_forward.1} parent=1 // pred_check
      _
    $region3: #{actor_forward.1} parent=1 // pred_check_branch
      %11 = sbr.rel (0) target = $region5
    $region4: #{actor_forward.1} parent=1 // pred_region
      _
    $region5: #{actor_forward.1} parent=1 // pred_fallthru
      _
    // Predicated region
    $region6: #{actor_forward.1} parent=1 // pred_check
      _
    $region7: #{actor_forward.1} parent=1 // pred_check_branch
      %13 = sbr.rel (0) target = $region9
    $region8: #{actor_forward.1} parent=1 // pred_region
      _
    $region9: #{actor_forward.1} parent=1 // pred_fallthru
      _
    // Predicated region
    $region10: #{actor_forward.1} parent=1 // pred_check
      _
    $region11: #{actor_forward.1} parent=1 // pred_check_branch
      %15 = sbr.rel (0) target = $region13
    $region12: #{actor_forward.1} parent=1 // pred_region
      %s17 = ssub.s32 6144, 6144
      %18 = vsyncadd [#allocation3], %s17
      %s19 = sshll.u32 [#allocation2], 4
      %s20 = int_to_ptr.vmem [resolvable:$true] %s19
      %25 = dma.hbm_to_vmem [thread:$0]  %s2, 6144, %s20, [#allocation3], 192, 192, 12
    $region13: #{actor_forward.1} parent=1 // pred_fallthru
      _
    // Predicated region
    $region14: #{actor_forward.1} parent=1 // pred_check
      _
    $region15: #{actor_forward.1} parent=1 // pred_check_branch
      %27 = sbr.rel (0) target = $region17
    $region16: #{actor_forward.1} parent=1 // pred_region
      _
    $region17: #{actor_forward.1} parent=1 // pred_fallthru
      _
    // Predicated region
    $region18: #{actor_forward.1} parent=1 // pred_check
      _
    $region19: #{actor_forward.1} parent=1 // pred_check_branch
      %29 = sbr.rel (0) target = $region21
    $region20: #{actor_forward.1} parent=1 // pred_region
      %30 = dma.done [#allocation3], 6144
    $region21: #{actor_forward.1} parent=1 // pred_fallthru
      _
    %v32 = vld [vmem:[%s0] sm:$0xff]
    %v33 = vld [vmem:[%s0 + $0x8] sm:$0xff]
    %v34 = vpack.c.bf16 %v33, %v32
    %v35 = vld [vmem:[%s1] sm:$0xff]
    %v36 = vld [vmem:[%s1 + $0x8] sm:$0xff]
    %v37 = vld [vmem:[%s3] ss:$4 sm:$0x3]
    %v39 = vlaneseq
    %v40 = vshrl.u32 %v39, 7
    %v41 = vsub.s32 0, %v40
    %v42 = vrot.slane %v37, %v41
    %v43 = vlaneseq
    %v44 = vshrl.u32 %v43, 7
    %v45 = vsub.s32 1, %v44
    %v46 = vrot.slane %v37, %v45
    %v51 = vunpack.c.l.b16 %v35
    %v52 = vunpack.c.h.b16 %v35
    %v53 = vunpack.c.l.b16 %v36
    %v54 = vunpack.c.h.b16 %v36
    %v55 = vpack.c.b16 %v53, %v51
    %v56 = vpack.c.b16 %v54, %v52
    %vm59 = vcmask 130048
    %v61 = vsel %vm59, %v34, 0
    %63 = vmatprep.subr.bf16.mxu0 %v56
    %64 = vmatpush1.bf16.msra.mxu0 %v55
    %65 = vmatprep.subr.bf16.mxu0 0
    %66 = vmatpush1.bf16.msra.mxu0 0
    %67 = vmatprep.subr.bf16.mxu0 0
    %68 = vmatpush1.bf16.msra.mxu0 0
    %69 = vmatprep.subr.bf16.mxu0 0
    %70 = vmatpush1.bf16.msra.mxu0 0
    %71 = vmatprep.subr.bf16.mxu0 0
    %72 = vmatpush1.bf16.msra.mxu0 0
    %73 = vmatprep.subr.bf16.mxu0 0
    %74 = vmatpush1.bf16.msra.mxu0 0
    %75 = vmatprep.subr.bf16.mxu0 0
    %76 = vmatpush1.bf16.msra.mxu0 0
    %77 = vmatprep.subr.bf16.mxu0 0
    %78 = vmatpush1.bf16.msra.mxu0 0
    %79 = vmatprep.subr.bf16.mxu0 0
    %80 = vmatpush1.bf16.msra.mxu0 0
    %81 = vmatprep.subr.bf16.mxu0 0
    %82 = vmatpush1.bf16.msra.mxu0 0
    %83 = vmatprep.subr.bf16.mxu0 0
    %84 = vmatpush1.bf16.msra.mxu0 0
    %85 = vmatprep.subr.bf16.mxu0 0
    %86 = vmatpush1.bf16.msra.mxu0 0
    %87 = vmatprep.subr.bf16.mxu0 0
    %88 = vmatpush1.bf16.msra.mxu0 0
    %89 = vmatprep.subr.bf16.mxu0 0
    %90 = vmatpush1.bf16.msra.mxu0 0
    %91 = vmatprep.subr.bf16.mxu0 0
    %92 = vmatpush1.bf16.msra.mxu0 0
    %93 = vmatprep.subr.bf16.mxu0 0
    %94 = vmatpush1.bf16.msra.mxu0 0
    %95 = vmatprep.mubr.bf16.mxu0 0
    %96 = vmatmul.mubr.bf16.gmra.mrb[0].mxu0 %v61
    %v97 = vpop.f32.mrb[0].mxu0
    %v98 = vadd.f32 %v42, %v97
    %v99 = vpop.f32.mrb[0].mxu0
    %v100 = vadd.f32 %v46, %v99
    %v101 = vpop.f32.mrb[0].mxu0
    %v102 = vadd.f32 %v42, %v101
    %v103 = vpop.f32.mrb[0].mxu0
    %v104 = vadd.f32 %v46, %v103
    %105 = vdwg.mxu0
    %v106 = vmax.f32 %v98, 0.0
    %v107 = vmax.f32 %v100, 0.0
    %v108 = vmax.f32 %v102, 0.0
    %v109 = vmax.f32 %v104, 0.0
    %v110 = vpack.c.bf16 %v108, %v106
    %v111 = vpack.c.bf16 %v109, %v107
    %v112 = vld [vmem:[#allocation2] sm:$0xff]
    %v113 = vld [vmem:[#allocation2 + $0xc] sm:$0xff]
    %v114 = vld [vmem:[#allocation2 + $0x18] sm:$0xff]
    %v115 = vld [vmem:[#allocation2 + $0x24] sm:$0xff]
    %v116 = vld [vmem:[#allocation2 + $0x30] sm:$0xff]
    %v117 = vld [vmem:[#allocation2 + $0x3c] sm:$0xff]
    %v118 = vld [vmem:[#allocation2 + $0x48] sm:$0xff]
    %v119 = vld [vmem:[#allocation2 + $0x54] sm:$0xff]
    %v120 = vld [vmem:[#allocation2 + $0x60] sm:$0xff]
    %v121 = vld [vmem:[#allocation2 + $0x6c] sm:$0xff]
    %v122 = vld [vmem:[#allocation2 + $0x78] sm:$0xff]
    %v123 = vld [vmem:[#allocation2 + $0x84] sm:$0xff]
    %v124 = vld [vmem:[#allocation2 + $0x90] sm:$0xff]
    %v125 = vld [vmem:[#allocation2 + $0x9c] sm:$0xff]
    %v126 = vld [vmem:[#allocation2 + $0xa8] sm:$0xff]
    %v127 = vld [vmem:[#allocation2 + $0xb4] sm:$0xff]
    %v128 = vld [vmem:[#allocation2 + $0xc0] sm:$0xff]
    %v129 = vld [vmem:[#allocation2 + $0xcc] sm:$0xff]
    %v130 = vld [vmem:[#allocation2 + $0xd8] sm:$0xff]
    %v131 = vld [vmem:[#allocation2 + $0xe4] sm:$0xff]
    %v132 = vld [vmem:[#allocation2 + $0xf0] sm:$0xff]
    %v133 = vld [vmem:[#allocation2 + $0xfc] sm:$0xff]
    %v134 = vld [vmem:[#allocation2 + $0x108] sm:$0xff]
    %v135 = vld [vmem:[#allocation2 + $0x114] sm:$0xff]
    %v136 = vld [vmem:[#allocation2 + $0x120] sm:$0xff]
    %v137 = vld [vmem:[#allocation2 + $0x12c] sm:$0xff]
    %v138 = vld [vmem:[#allocation2 + $0x138] sm:$0xff]
    %v139 = vld [vmem:[#allocation2 + $0x144] sm:$0xff]
    %v140 = vld [vmem:[#allocation2 + $0x150] sm:$0xff]
    %v141 = vld [vmem:[#allocation2 + $0x15c] sm:$0xff]
    %v142 = vld [vmem:[#allocation2 + $0x168] sm:$0xff]
    %v143 = vld [vmem:[#allocation2 + $0x174] sm:$0xff]
    %s144 = scalar_lea.vmem %s3, 1
    %v145 = vld [vmem:[%s144] ss:$4 sm:$0x3]
    %v147 = vlaneseq
    %v148 = vshrl.u32 %v147, 7
    %v149 = vsub.s32 0, %v148
    %v150 = vrot.slane %v145, %v149
    %v151 = vlaneseq
    %v152 = vshrl.u32 %v151, 7
    %v153 = vsub.s32 1, %v152
    %v154 = vrot.slane %v145, %v153
    %v189 = vunpack.c.l.b16 %v112
    %v190 = vunpack.c.h.b16 %v112
    %v191 = vunpack.c.l.b16 %v113
    %v192 = vunpack.c.h.b16 %v113
    %v193 = vunpack.c.l.b16 %v114
    %v194 = vunpack.c.h.b16 %v114
    %v195 = vunpack.c.l.b16 %v115
    %v196 = vunpack.c.h.b16 %v115
    %v197 = vunpack.c.l.b16 %v116
    %v198 = vunpack.c.h.b16 %v116
    %v199 = vunpack.c.l.b16 %v117
    %v200 = vunpack.c.h.b16 %v117
    %v201 = vunpack.c.l.b16 %v118
    %v202 = vunpack.c.h.b16 %v118
    %v203 = vunpack.c.l.b16 %v119
    %v204 = vunpack.c.h.b16 %v119
    %v205 = vunpack.c.l.b16 %v120
    %v206 = vunpack.c.h.b16 %v120
    %v207 = vunpack.c.l.b16 %v121
    %v208 = vunpack.c.h.b16 %v121
    %v209 = vunpack.c.l.b16 %v122
    %v210 = vunpack.c.h.b16 %v122
    %v211 = vunpack.c.l.b16 %v123
    %v212 = vunpack.c.h.b16 %v123
    %v213 = vunpack.c.l.b16 %v124
    %v214 = vunpack.c.h.b16 %v124
    %v215 = vunpack.c.l.b16 %v125
    %v216 = vunpack.c.h.b16 %v125
    %v217 = vunpack.c.l.b16 %v126
    %v218 = vunpack.c.h.b16 %v126
    %v219 = vunpack.c.l.b16 %v127
    %v220 = vunpack.c.h.b16 %v127
    %v221 = vunpack.c.l.b16 %v128
    %v222 = vunpack.c.h.b16 %v128
    %v223 = vunpack.c.l.b16 %v129
    %v224 = vunpack.c.h.b16 %v129
    %v225 = vunpack.c.l.b16 %v130
    %v226 = vunpack.c.h.b16 %v130
    %v227 = vunpack.c.l.b16 %v131
    %v228 = vunpack.c.h.b16 %v131
    %v229 = vunpack.c.l.b16 %v132
    %v230 = vunpack.c.h.b16 %v132
    %v231 = vunpack.c.l.b16 %v133
    %v232 = vunpack.c.h.b16 %v133
    %v233 = vunpack.c.l.b16 %v134
    %v234 = vunpack.c.h.b16 %v134
    %v235 = vunpack.c.l.b16 %v135
    %v236 = vunpack.c.h.b16 %v135
    %v237 = vunpack.c.l.b16 %v136
    %v238 = vunpack.c.h.b16 %v136
    %v239 = vunpack.c.l.b16 %v137
    %v240 = vunpack.c.h.b16 %v137
    %v241 = vunpack.c.l.b16 %v138
    %v242 = vunpack.c.h.b16 %v138
    %v243 = vunpack.c.l.b16 %v139
    %v244 = vunpack.c.h.b16 %v139
    %v245 = vunpack.c.l.b16 %v140
    %v246 = vunpack.c.h.b16 %v140
    %v247 = vunpack.c.l.b16 %v141
    %v248 = vunpack.c.h.b16 %v141
    %v249 = vunpack.c.l.b16 %v142
    %v250 = vunpack.c.h.b16 %v142
    %v251 = vunpack.c.l.b16 %v143
    %v252 = vunpack.c.h.b16 %v143
    %v253 = vpack.c.b16 %v191, %v189
    %v254 = vpack.c.b16 %v192, %v190
    %v255 = vpack.c.b16 %v195, %v193
    %v256 = vpack.c.b16 %v196, %v194
    %v257 = vpack.c.b16 %v199, %v197
    %v258 = vpack.c.b16 %v200, %v198
    %v259 = vpack.c.b16 %v203, %v201
    %v260 = vpack.c.b16 %v204, %v202
    %v261 = vpack.c.b16 %v207, %v205
    %v262 = vpack.c.b16 %v208, %v206
    %v263 = vpack.c.b16 %v211, %v209
    %v264 = vpack.c.b16 %v212, %v210
    %v265 = vpack.c.b16 %v215, %v213
    %v266 = vpack.c.b16 %v216, %v214
    %v267 = vpack.c.b16 %v219, %v217
    %v268 = vpack.c.b16 %v220, %v218
    %v269 = vpack.c.b16 %v223, %v221
    %v270 = vpack.c.b16 %v224, %v222
    %v271 = vpack.c.b16 %v227, %v225
    %v272 = vpack.c.b16 %v228, %v226
    %v273 = vpack.c.b16 %v231, %v229
    %v274 = vpack.c.b16 %v232, %v230
    %v275 = vpack.c.b16 %v235, %v233
    %v276 = vpack.c.b16 %v236, %v234
    %v277 = vpack.c.b16 %v239, %v237
    %v278 = vpack.c.b16 %v240, %v238
    %v279 = vpack.c.b16 %v243, %v241
    %v280 = vpack.c.b16 %v244, %v242
    %v281 = vpack.c.b16 %v247, %v245
    %v282 = vpack.c.b16 %v248, %v246
    %v283 = vpack.c.b16 %v251, %v249
    %v284 = vpack.c.b16 %v252, %v250
    %317 = vmatprep.subr.bf16.mxu0 %v254
    %318 = vmatpush1.bf16.msra.mxu0 %v253
    %319 = vmatprep.subr.bf16.mxu0 %v256
    %320 = vmatpush1.bf16.msra.mxu0 %v255
    %321 = vmatprep.subr.bf16.mxu0 %v258
    %322 = vmatpush1.bf16.msra.mxu0 %v257
    %323 = vmatprep.subr.bf16.mxu0 %v260
    %324 = vmatpush1.bf16.msra.mxu0 %v259
    %325 = vmatprep.subr.bf16.mxu0 %v262
    %326 = vmatpush1.bf16.msra.mxu0 %v261
    %327 = vmatprep.subr.bf16.mxu0 %v264
    %328 = vmatpush1.bf16.msra.mxu0 %v263
    %329 = vmatprep.subr.bf16.mxu0 %v266
    %330 = vmatpush1.bf16.msra.mxu0 %v265
    %331 = vmatprep.subr.bf16.mxu0 %v268
    %332 = vmatpush1.bf16.msra.mxu0 %v267
    %333 = vmatprep.subr.bf16.mxu0 %v270
    %334 = vmatpush1.bf16.msra.mxu0 %v269
    %335 = vmatprep.subr.bf16.mxu0 %v272
    %336 = vmatpush1.bf16.msra.mxu0 %v271
    %337 = vmatprep.subr.bf16.mxu0 %v274
    %338 = vmatpush1.bf16.msra.mxu0 %v273
    %339 = vmatprep.subr.bf16.mxu0 %v276
    %340 = vmatpush1.bf16.msra.mxu0 %v275
    %341 = vmatprep.subr.bf16.mxu0 %v278
    %342 = vmatpush1.bf16.msra.mxu0 %v277
    %343 = vmatprep.subr.bf16.mxu0 %v280
    %344 = vmatpush1.bf16.msra.mxu0 %v279
    %345 = vmatprep.subr.bf16.mxu0 %v282
    %346 = vmatpush1.bf16.msra.mxu0 %v281
    %347 = vmatprep.subr.bf16.mxu0 %v284
    %348 = vmatpush1.bf16.msra.mxu0 %v283
    %349 = vmatprep.mubr.bf16.mxu0 %v111
    %350 = vmatmul.mubr.bf16.gmra.mrb[0].mxu0 %v110
    %v351 = vpop.f32.mrb[0].mxu0
    %v352 = vadd.f32 %v150, %v351
    %v353 = vpop.f32.mrb[0].mxu0
    %v354 = vadd.f32 %v154, %v353
    %v355 = vpop.f32.mrb[0].mxu0
    %v356 = vadd.f32 %v150, %v355
    %v357 = vpop.f32.mrb[0].mxu0
    %v358 = vadd.f32 %v154, %v357
    %359 = vdwg.mxu0
    %v360 = vmax.f32 %v352, 0.0
    %v361 = vmax.f32 %v354, 0.0
    %v362 = vmax.f32 %v356, 0.0
    %v363 = vmax.f32 %v358, 0.0
    %v364 = vpack.c.bf16 %v362, %v360
    %v365 = vpack.c.bf16 %v363, %v361
    %v366 = vld [vmem:[#allocation2 + $0x8] sm:$0xf]
    %v367 = vld [vmem:[#allocation2 + $0x14] sm:$0xf]
    %v368 = vld [vmem:[#allocation2 + $0x20] sm:$0xf]
    %v369 = vld [vmem:[#allocation2 + $0x2c] sm:$0xf]
    %v370 = vld [vmem:[#allocation2 + $0x38] sm:$0xf]
    %v371 = vld [vmem:[#allocation2 + $0x44] sm:$0xf]
    %v372 = vld [vmem:[#allocation2 + $0x50] sm:$0xf]
    %v373 = vld [vmem:[#allocation2 + $0x5c] sm:$0xf]
    %v374 = vld [vmem:[#allocation2 + $0x68] sm:$0xf]
    %v375 = vld [vmem:[#allocation2 + $0x74] sm:$0xf]
    %v376 = vld [vmem:[#allocation2 + $0x80] sm:$0xf]
    %v377 = vld [vmem:[#allocation2 + $0x8c] sm:$0xf]
    %v378 = vld [vmem:[#allocation2 + $0x98] sm:$0xf]
    %v379 = vld [vmem:[#allocation2 + $0xa4] sm:$0xf]
    %v380 = vld [vmem:[#allocation2 + $0xb0] sm:$0xf]
    %v381 = vld [vmem:[#allocation2 + $0xbc] sm:$0xf]
    %v382 = vld [vmem:[#allocation2 + $0xc8] sm:$0xf]
    %v383 = vld [vmem:[#allocation2 + $0xd4] sm:$0xf]
    %v384 = vld [vmem:[#allocation2 + $0xe0] sm:$0xf]
    %v385 = vld [vmem:[#allocation2 + $0xec] sm:$0xf]
    %v386 = vld [vmem:[#allocation2 + $0xf8] sm:$0xf]
    %v387 = vld [vmem:[#allocation2 + $0x104] sm:$0xf]
    %v388 = vld [vmem:[#allocation2 + $0x110] sm:$0xf]
    %v389 = vld [vmem:[#allocation2 + $0x11c] sm:$0xf]
    %v390 = vld [vmem:[#allocation2 + $0x128] sm:$0xf]
    %v391 = vld [vmem:[#allocation2 + $0x134] sm:$0xf]
    %v392 = vld [vmem:[#allocation2 + $0x140] sm:$0xf]
    %v393 = vld [vmem:[#allocation2 + $0x14c] sm:$0xf]
    %v394 = vld [vmem:[#allocation2 + $0x158] sm:$0xf]
    %v395 = vld [vmem:[#allocation2 + $0x164] sm:$0xf]
    %v396 = vld [vmem:[#allocation2 + $0x170] sm:$0xf]
    %v397 = vld [vmem:[#allocation2 + $0x17c] sm:$0xf]
    %v398 = vld [vmem:[%s3 + $0x2] sm:$0x1]
    %v399 = vlaneseq
    %v400 = vshrl.u32 %v399, 7
    %v401 = vsub.s32 0, %v400
    %v402 = vrot.slane %v398, %v401
    %v435 = vunpack.c.l.b16 %v366
    %v436 = vunpack.c.l.b16 %v367
    %v437 = vunpack.c.l.b16 %v368
    %v438 = vunpack.c.l.b16 %v369
    %v439 = vunpack.c.l.b16 %v370
    %v440 = vunpack.c.l.b16 %v371
    %v441 = vunpack.c.l.b16 %v372
    %v442 = vunpack.c.l.b16 %v373
    %v443 = vunpack.c.l.b16 %v374
    %v444 = vunpack.c.l.b16 %v375
    %v445 = vunpack.c.l.b16 %v376
    %v446 = vunpack.c.l.b16 %v377
    %v447 = vunpack.c.l.b16 %v378
    %v448 = vunpack.c.l.b16 %v379
    %v449 = vunpack.c.l.b16 %v380
    %v450 = vunpack.c.l.b16 %v381
    %v451 = vunpack.c.l.b16 %v382
    %v452 = vunpack.c.l.b16 %v383
    %v453 = vunpack.c.l.b16 %v384
    %v454 = vunpack.c.l.b16 %v385
    %v455 = vunpack.c.l.b16 %v386
    %v456 = vunpack.c.l.b16 %v387
    %v457 = vunpack.c.l.b16 %v388
    %v458 = vunpack.c.l.b16 %v389
    %v459 = vunpack.c.l.b16 %v390
    %v460 = vunpack.c.l.b16 %v391
    %v461 = vunpack.c.l.b16 %v392
    %v462 = vunpack.c.l.b16 %v393
    %v463 = vunpack.c.l.b16 %v394
    %v464 = vunpack.c.l.b16 %v395
    %v465 = vunpack.c.l.b16 %v396
    %v466 = vunpack.c.l.b16 %v397
    %v467 = vpack.c.b16 %v436, %v435
    %v468 = vpack.c.b16 %v438, %v437
    %v469 = vpack.c.b16 %v440, %v439
    %v470 = vpack.c.b16 %v442, %v441
    %v471 = vpack.c.b16 %v444, %v443
    %v472 = vpack.c.b16 %v446, %v445
    %v473 = vpack.c.b16 %v448, %v447
    %v474 = vpack.c.b16 %v450, %v449
    %v475 = vpack.c.b16 %v452, %v451
    %v476 = vpack.c.b16 %v454, %v453
    %v477 = vpack.c.b16 %v456, %v455
    %v478 = vpack.c.b16 %v458, %v457
    %v479 = vpack.c.b16 %v460, %v459
    %v480 = vpack.c.b16 %v462, %v461
    %v481 = vpack.c.b16 %v464, %v463
    %v482 = vpack.c.b16 %v466, %v465
    %499 = vmatprep.subr.bf16.mxu0 0
    %500 = vmatpush1.bf16.msra.mxu0 %v467
    %501 = vmatprep.subr.bf16.mxu0 0
    %502 = vmatpush1.bf16.msra.mxu0 %v468
    %503 = vmatprep.subr.bf16.mxu0 0
    %504 = vmatpush1.bf16.msra.mxu0 %v469
    %505 = vmatprep.subr.bf16.mxu0 0
    %506 = vmatpush1.bf16.msra.mxu0 %v470
    %507 = vmatprep.subr.bf16.mxu0 0
    %508 = vmatpush1.bf16.msra.mxu0 %v471
    %509 = vmatprep.subr.bf16.mxu0 0
    %510 = vmatpush1.bf16.msra.mxu0 %v472
    %511 = vmatprep.subr.bf16.mxu0 0
    %512 = vmatpush1.bf16.msra.mxu0 %v473
    %513 = vmatprep.subr.bf16.mxu0 0
    %514 = vmatpush1.bf16.msra.mxu0 %v474
    %515 = vmatprep.subr.bf16.mxu0 0
    %516 = vmatpush1.bf16.msra.mxu0 %v475
    %517 = vmatprep.subr.bf16.mxu0 0
    %518 = vmatpush1.bf16.msra.mxu0 %v476
    %519 = vmatprep.subr.bf16.mxu0 0
    %520 = vmatpush1.bf16.msra.mxu0 %v477
    %521 = vmatprep.subr.bf16.mxu0 0
    %522 = vmatpush1.bf16.msra.mxu0 %v478
    %523 = vmatprep.subr.bf16.mxu0 0
    %524 = vmatpush1.bf16.msra.mxu0 %v479
    %525 = vmatprep.subr.bf16.mxu0 0
    %526 = vmatpush1.bf16.msra.mxu0 %v480
    %527 = vmatprep.subr.bf16.mxu0 0
    %528 = vmatpush1.bf16.msra.mxu0 %v481
    %529 = vmatprep.subr.bf16.mxu0 0
    %530 = vmatpush1.bf16.msra.mxu0 %v482
    %531 = vmatprep.mubr.bf16.mxu0 %v365
    %532 = vmatmul.mubr.bf16.gmra.mrb[0].mxu0 %v364
    %v533 = vpop.f32.mrb[0].mxu0
    %v534 = vadd.f32 %v402, %v533
    %v535 = vpop.f32.mrb[0].mxu0
    %v536 = vpop.f32.mrb[0].mxu0
    %v537 = vadd.f32 %v402, %v536
    %v538 = vpop.f32.mrb[0].mxu0
    %539 = vdwg.mxu0
    %v540 = vtanh.pop %v534
    %v541 = vtanh.pop %v537
    %v542 = vmul.f32 %v540, 3.5
    %v543 = vmul.f32 %v541, 3.5
    %v544 = vadd.f32 %v542, -1.5
    %v545 = vadd.f32 %v543, -1.5
    %v546 = vlaneseq
    %v547 = vand.u32 %v546, 127
    %vm548 = vcmp.ge.s32.totalorder %v547, 6
    %v549 = vsel %vm548, %v544, %v534
    %v550 = vsel %vm548, %v545, %v537
    %551 = vst [vmem:[%s4] sm:$0xff] %v549
    %552 = vst [vmem:[%s4 + $0x8] sm:$0xff] %v550
    // Predicated region
    $region22: #{actor_forward.1} parent=1 // pred_check
      _
    $region23: #{actor_forward.1} parent=1 // pred_check_branch
      %554 = sbr.rel (0) target = $region25
    $region24: #{actor_forward.1} parent=1 // pred_region
      _
    $region25: #{actor_forward.1} parent=1 // pred_fallthru
      _
    // Predicated region
    $region26: #{actor_forward.1} parent=1 // pred_check
      _
    $region27: #{actor_forward.1} parent=1 // pred_check_branch
      %556 = sbr.rel (0) target = $region29
    $region28: #{actor_forward.1} parent=1 // pred_region
      _
    $region29: #{actor_forward.1} parent=1 // pred_fallthru
      _
    %557 = vsyncpa [#allocation3], 1

</llo_original>
